<compile_context>
chip_gen: v5e
topology: v5e:2x2
jax: 0.10.0
libtpu: 0.0.40
codegen_flags: <defaults>
</compile_context>

<pallas_src>
import functools

import jax
import jax.numpy as jnp
from jax import lax
from jax.experimental import pallas as pl
from jax.experimental.pallas import tpu as pltpu


# ----------------------------------------------------------------------------
# Kernel
# ----------------------------------------------------------------------------
def _make_kernel(TB, S, D, TK, TN, NK, NN, w_dtype):
    """Build the per-grid-step kernel, statically specialized on the tiling.

    Grid = (batch_tile, n_tile, k_tile), K innermost.
    Refs:
      x_ref   : (TB, S, D)   f32 input slab (changes only with the batch axis)
      w_ref   : (3, TK, TN)  stacked [Wq^T, Wk^T, Wv^T] tile (f32 or bf16)
      b_ref   : (3, 1, TN)   stacked bias tile (f32)
      o_ref   : (TB, D)      per-batch-tile output (mean over the sequence)
      y_ref   : (TB*S, D)    f32 scratch: cosine-weighted activations
      qkv_ref : (3, TB*S, D) f32 scratch: streamed QKV accumulator
    """
    TBS = TB * S
    single = (NK == 1 and NN == 1)

    def kernel(x_ref, w_ref, b_ref, o_ref, y_ref, qkv_ref):
        ni = pl.program_id(1)
        ki = pl.program_id(2)

        # ---- prologue (once per batch tile): cosine-similarity weighting ----
        def prologue():
            x = x_ref[...]                                         # (TB, S, D)
            center = x[:, S // 2 + 1:S // 2 + 2, :]                # (TB, 1, D)
            dots = jnp.sum(x * center, axis=-1, keepdims=True)     # (TB, S, 1)
            x_sq = jnp.sum(x * x, axis=-1, keepdims=True)          # (TB, S, 1)
            c_sq = jnp.sum(center * center, axis=-1, keepdims=True)
            # dots / max(|x||c|, eps) == dots * rsqrt(max(|x|^2|c|^2, eps^2))
            wgt = dots * lax.rsqrt(jnp.maximum(x_sq * c_sq, jnp.float32(1e-16)))
            y_ref[...] = (x * wgt).reshape(TBS, D)

        if single:
            prologue()
        else:
            pl.when(jnp.logical_and(ni == 0, ki == 0))(prologue)

        # ---- streamed fused Q/K/V projection (accumulated over K tiles) -----
        if NK == 1:
            y_blk = y_ref[...]                                     # (TBS, D)
        else:
            koff = pl.multiple_of(ki * TK, TK)
            y_blk = y_ref[:, pl.ds(koff, TK)]                      # (TBS, TK)
        # bf16 path: activations are quantized to the weight dtype for the MXU
        # (f32 accumulation) -- deliberate and covered by the bf16 test.
        y_blk = y_blk.astype(w_dtype)

        if NN == 1:
            nsl = slice(None)
        else:
            noff = pl.multiple_of(ni * TN, TN)
            nsl = pl.ds(noff, TN)

        for g in range(3):                                         # q, k, v
            part = jnp.dot(y_blk, w_ref[g], preferred_element_type=jnp.float32)
            if NK == 1:
                qkv_ref[g, :, nsl] = part + b_ref[g]
            else:
                @pl.when(ki == 0)
                def _(part=part, g=g):
                    qkv_ref[g, :, nsl] = part + b_ref[g]

                @pl.when(ki > 0)
                def _(part=part, g=g):
                    qkv_ref[g, :, nsl] = qkv_ref[g, :, nsl] + part

        # ---- epilogue (once per batch tile): attention + sequence mean ------
        def epilogue():
            q = qkv_ref[0].reshape(TB, S, D)
            k = qkv_ref[1].reshape(TB, S, D)
            v = qkv_ref[2].reshape(TB, S, D)
            # No 1/sqrt(D) scale (matches the PyTorch reference). NT contraction.
            scores = jnp.einsum('bqd,bkd->bqk', q, k,
                                preferred_element_type=jnp.float32)  # (TB,S,S)
            m = jnp.max(scores, axis=-1, keepdims=True)
            p = jnp.exp(scores - m)
            denom = jnp.sum(p, axis=-1, keepdims=True)               # (TB,S,1)
            # Fold softmax normalization AND the final mean over query rows
            # into one per-row scale (exact division -- tight tolerances):
            #   mean_q(softmax(scores) @ v) == (mean_q of attn rows) @ v
            row_scale = jnp.float32(1.0 / S) / denom                 # (TB,S,1)
            attn_mean = jnp.sum(p * row_scale, axis=1, keepdims=True)  # (TB,1,S)
            out = jnp.einsum('bqk,bkd->bqd', attn_mean, v,
                             preferred_element_type=jnp.float32)     # (TB,1,D)
            o_ref[...] = out.reshape(TB, D)

        if single:
            epilogue()
        else:
            pl.when(jnp.logical_and(ni == NN - 1, ki == NK - 1))(epilogue)

    return kernel


# ----------------------------------------------------------------------------
# Tiling / VMEM heuristics
# ----------------------------------------------------------------------------
@functools.lru_cache(maxsize=None)
def _vmem_cap_bytes():
    try:
        return int(pltpu.get_tpu_info().vmem_capacity_bytes)
    except Exception:
        return 64 * 2 ** 20          # conservative fallback (v7x per-core VMEM)


def _batch_tile(B, S, D):
    """Batch elements per grid step.  Aim for TB*S >= 256 MXU rows (amortizes
    the ~0.35us/step overhead), subject to TB being a legal output block
    (TB == B or TB % 8 == 0) and the per-tile slabs staying small."""
    per_b = S * D * 4 * 5            # x + y + 3x qkv scratch, f32 bytes
    max_tb = max(1, (24 * 2 ** 20) // max(per_b, 1))
    if B <= max_tb:
        return B
    cands = [d for d in range(8, B, 8)
             if B % d == 0 and d <= max_tb and d * S >= 256]
    if cands:
        return max(cands)
    cands = [d for d in range(8, B, 8) if B % d == 0 and d <= max_tb]
    return max(cands) if cands else B


def _weight_tiles(D, w_itemsize):
    """(TK, TN) for streaming the stacked (3, D, D) weight.  Whole weight
    (grid-invariant, single-buffered) when small; 128-aligned chunks otherwise
    (mandatory at D=4096: 96 MiB bf16 exceeds v7x's 64 MiB VMEM)."""
    whole = 3 * D * D * w_itemsize
    if D % 128 != 0 or whole <= 8 * 2 ** 20:
        return D, D
    tk = 512 if D % 512 == 0 else (256 if D % 256 == 0 else 128)
    tn = 1024 if D % 1024 == 0 else (512 if D % 512 == 0 else 128)
    return tk, tn


# ----------------------------------------------------------------------------
# Parameter prep + forward
# ----------------------------------------------------------------------------
def prepare_qkv_params(wq, bq, wk, bk, wv, bv, weight_dtype=jnp.float32):
    """Transpose + stack the nn.Linear params ONCE, outside the hot path.
    Stacking on a leading axis (3, D, D) keeps the q/k/v split on a non-lane
    axis inside the kernel (free views for any D)."""
    w = jnp.stack([wq.T, wk.T, wv.T], axis=0).astype(weight_dtype)   # (3, D, D)
    b = jnp.stack([bq, bk, bv], axis=0).reshape(3, 1, -1).astype(jnp.float32)
    return w, b


def cosine_al_seqnet_forward(x, wqkv, bqkv):
    """x: (B, S, D) f32.  wqkv: (3, D, D) stacked transposed weights (f32/bf16).
    bqkv: (3, 1, D) f32 biases.  Returns (B, D) f32."""
    B, S, D = x.shape
    assert S >= 3, "cosine_sim indexes frame S//2 + 1; requires S >= 3"
    assert wqkv.shape == (3, D, D) and bqkv.shape == (3, 1, D)

    w_itemsize = jnp.dtype(wqkv.dtype).itemsize
    TB = _batch_tile(B, S, D)
    TK, TN = _weight_tiles(D, w_itemsize)
    NK, NN = D // TK, D // TN
    nbt = B // TB
    TBS = TB * S

    # Single-buffer grid-invariant operands (review item 1).
    xbuf = 1 if nbt == 1 else 2
    wbuf = 1 if (NK == 1 and NN == 1) else 2
    bbuf = 1 if NN == 1 else 2

    def _spec(shape, index_map, bufs):
        if bufs == 1:
            try:
                return pl.BlockSpec(shape, index_map,
                                    pipeline_mode=pl.Buffered(1))
            except Exception:
                pass
        return pl.BlockSpec(shape, index_map)

    # VMEM budget: pipeline buffers + scratches + in-kernel temporaries,
    # capped at ~85% of this generation's physical VMEM.
    need = (xbuf * TB * S * D * 4
            + wbuf * 3 * TK * TN * w_itemsize
            + bbuf * 3 * TN * 4
            + 2 * TB * D * 4                 # output block
            + TBS * D * 4                    # y scratch
            + 3 * TBS * D * 4                # qkv accumulator scratch
            + 2 * TB * S * S * 4             # scores + p temporaries
            + 3 * TBS * TN * 4)              # matmul partials
    cap = _vmem_cap_bytes()
    vmem_limit = int(min(int(cap * 0.85), max(32 * 2 ** 20, int(need * 1.5))))

    # Scheduler cost hint.
    flops = B * (2 * S * D * 3 * D           # fused QKV projection
                 + 2 * S * S * D             # q @ k^T
                 + 2 * S * D                 # (1,S) @ (S,D) per batch
                 + 12 * S * D)               # elementwise
    transcendentals = B * (S * S + S)
    weight_passes = nbt if (NK > 1 or NN > 1) else 1
    bytes_accessed = (x.size * 4 + wqkv.size * w_itemsize * weight_passes
                      + bqkv.size * 4 + B * D * 4)

    kernel = _make_kernel(TB, S, D, TK, TN, NK, NN, wqkv.dtype)

    return pl.pallas_call(
        kernel,
        out_shape=jax.ShapeDtypeStruct((B, D), jnp.float32),
        grid_spec=pltpu.PrefetchScalarGridSpec(
            num_scalar_prefetch=0,
            grid=(nbt, NN, NK),                                   # K innermost
            in_specs=[
                _spec((TB, S, D), lambda b, n, k: (b, 0, 0), xbuf),   # x slab
                _spec((3, TK, TN), lambda b, n, k: (0, k, n), wbuf),  # weights
                _spec((3, 1, TN), lambda b, n, k: (0, 0, n), bbuf),   # biases
            ],
            out_specs=pl.BlockSpec((TB, D), lambda b, n, k: (b, 0)),
            scratch_shapes=[
                pltpu.VMEM((TBS, D), jnp.float32),       # cosine-weighted y
                pltpu.VMEM((3, TBS, D), jnp.float32),    # qkv accumulator
            ],
        ),
        compiler_params=pltpu.CompilerParams(
            dimension_semantics=("parallel", "arbitrary", "arbitrary"),
            vmem_limit_bytes=vmem_limit),
        cost_estimate=pl.CostEstimate(flops=flops,
                                      transcendentals=transcendentals,
                                      bytes_accessed=bytes_accessed),
    )(x, wqkv, bqkv)


# ----------------------------------------------------------------------------
# Pure-JAX reference (mirror of the PyTorch forward) + test harness
# ----------------------------------------------------------------------------
def _reference(x, wq, bq, wk, bk, wv, bv):
    B, S, D = x.shape
    c = x[:, S // 2 + 1: S // 2 + 2, :]
    dots = jnp.sum(x * c, axis=-1, keepdims=True)
    xn = jnp.sqrt(jnp.sum(x * x, axis=-1, keepdims=True))
    cn = jnp.sqrt(jnp.sum(c * c, axis=-1, keepdims=True))
    w = dots / jnp.maximum(xn * cn, 1e-8)
    y = x * w
    q = y @ wq.T + bq
    k = y @ wk.T + bk
    v = y @ wv.T + bv
    scores = q @ jnp.swapaxes(k, -1, -2)
    attn = jax.nn.softmax(scores, axis=-1)
    z = attn @ v
    return jnp.mean(z, axis=1)


if __name__ == "__main__":
    fwd = jax.jit(cosine_al_seqnet_forward)

    def run_case(key, B, S, D, weight_dtype, rtol, atol):
        kx, kq, kbq, kk, kbk, kv, kbv = jax.random.split(key, 7)
        x = jax.random.normal(kx, (B, S, D), dtype=jnp.float32)
        scale = 1.0 / jnp.sqrt(jnp.float32(D))
        wq = jax.random.uniform(kq, (D, D), jnp.float32, -scale, scale)
        bq = jax.random.uniform(kbq, (D,), jnp.float32, -scale, scale)
        wk = jax.random.uniform(kk, (D, D), jnp.float32, -scale, scale)
        bk = jax.random.uniform(kbk, (D,), jnp.float32, -scale, scale)
        wv = jax.random.uniform(kv, (D, D), jnp.float32, -scale, scale)
        bv = jax.random.uniform(kbv, (D,), jnp.float32, -scale, scale)

        wqkv, bqkv = prepare_qkv_params(wq, bq, wk, bk, wv, bv, weight_dtype)
        out = jax.block_until_ready(fwd(x, wqkv, bqkv))
        ref = _reference(x, wq, bq, wk, bk, wv, bv)
        assert out.shape == (B, D), out.shape
        assert bool(jnp.all(jnp.isfinite(out)))
        err = float(jnp.max(jnp.abs(out - ref)))
        assert jnp.allclose(out, ref, rtol=rtol, atol=atol), err

    root = jax.random.PRNGKey(0)
    k1, k2, k3 = jax.random.split(root, 3)

    # Module-consistent small shapes: batch=2, seqL=8, inDims=32 (f32 weights,
    # exact division in-kernel -> tight tolerance).
    run_case(k1, B=2, S=8, D=32, weight_dtype=jnp.float32, rtol=1e-3, atol=1e-3)
    # bf16 weights: cosine-weighted activations are also quantized to bf16
    # before the MXU (f32 accumulation) -- documented, looser tolerance.
    run_case(k2, B=2, S=8, D=32, weight_dtype=jnp.bfloat16, rtol=6e-2, atol=6e-2)
    # Odd sequence length exercises the S//2 + 1 center-frame index.
    run_case(k3, B=4, S=5, D=32, weight_dtype=jnp.float32, rtol=1e-3, atol=1e-3)

    # nn.Conv1d(inDims, outDims, kernel_size=w) is defined in __init__ but
    # never used in forward() -> nothing to emit for it.

    print("KERNEL_OK")
</pallas_src>

<mosaic_0001>
module attributes {stable_mosaic.version = 11 : i64} {
  func.func @kernel(%arg0: i32, %arg1: i32, %arg2: i32, %arg3: memref<2x8x32xf32, #tpu.memory_space<vmem>>, %arg4: memref<3x32x32xf32, #tpu.memory_space<vmem>>, %arg5: memref<3x1x32xf32, #tpu.memory_space<vmem>>, %arg6: memref<2x32xf32, #tpu.memory_space<vmem>>, %arg7: memref<16x32xf32, #tpu.memory_space<vmem>>, %arg8: memref<3x16x32xf32, #tpu.memory_space<vmem>>) attributes {dimension_semantics = [#tpu.dimension_semantics<parallel>, #tpu.dimension_semantics<arbitrary>, #tpu.dimension_semantics<arbitrary>], iteration_bounds = array<i64: 1, 1, 1>, scalar_prefetch = 0 : i64, scratch_operands = 2 : i64, tpu.core_type = #tpu.core_type<tc>, window_params = [{pipeline_mode = #tpu.pipeline_mode<synchronous>, transform_indices = @transform_0, window_bounds = array<i64: 2, 8, 32>}, {pipeline_mode = #tpu.pipeline_mode<synchronous>, transform_indices = @transform_1, window_bounds = array<i64: 3, 32, 32>}, {pipeline_mode = #tpu.pipeline_mode<synchronous>, transform_indices = @transform_2, window_bounds = array<i64: 3, 1, 32>}, {transform_indices = @transform_3, window_bounds = array<i64: 2, 32>}]} {
    %c0 = arith.constant 0 : index
    %c0_0 = arith.constant 0 : index
    %c0_1 = arith.constant 0 : index
    %0 = vector.load %arg3[%c0, %c0_0, %c0_1] : memref<2x8x32xf32, #tpu.memory_space<vmem>>, vector<2x8x32xf32>
    %1 = vector.extract_strided_slice %0 {offsets = [0, 5, 0], sizes = [2, 1, 32], strides = [1, 1, 1]} : vector<2x8x32xf32> to vector<2x1x32xf32>
    %2 = vector.broadcast %1 : vector<2x1x32xf32> to vector<2x8x32xf32>
    %3 = arith.mulf %0, %2 : vector<2x8x32xf32>
    %cst = arith.constant dense<0.000000e+00> : vector<2x8xf32>
    %4 = vector.multi_reduction <add>, %3, %cst [2] : vector<2x8x32xf32> to vector<2x8xf32>
    %5 = vector.shape_cast %4 : vector<2x8xf32> to vector<2x8x1xf32>
    %6 = arith.mulf %0, %0 : vector<2x8x32xf32>
    %cst_2 = arith.constant dense<0.000000e+00> : vector<2x8xf32>
    %7 = vector.multi_reduction <add>, %6, %cst_2 [2] : vector<2x8x32xf32> to vector<2x8xf32>
    %8 = vector.shape_cast %7 : vector<2x8xf32> to vector<2x8x1xf32>
    %9 = arith.mulf %1, %1 : vector<2x1x32xf32>
    %cst_3 = arith.constant dense<0.000000e+00> : vector<2x1xf32>
    %10 = vector.multi_reduction <add>, %9, %cst_3 [2] : vector<2x1x32xf32> to vector<2x1xf32>
    %11 = vector.shape_cast %10 : vector<2x1xf32> to vector<2x1x1xf32>
    %12 = vector.broadcast %11 : vector<2x1x1xf32> to vector<2x8x1xf32>
    %13 = arith.mulf %8, %12 : vector<2x8x1xf32>
    %cst_4 = arith.constant 1.000000e-16 : f32
    %14 = vector.broadcast %cst_4 : f32 to vector<2x8x1xf32>
    %15 = arith.maximumf %13, %14 : vector<2x8x1xf32>
    %16 = math.rsqrt %15 : vector<2x8x1xf32>
    %17 = arith.mulf %5, %16 : vector<2x8x1xf32>
    %18 = vector.broadcast %17 : vector<2x8x1xf32> to vector<2x8x32xf32>
    %19 = arith.mulf %0, %18 : vector<2x8x32xf32>
    %20 = vector.shape_cast %19 : vector<2x8x32xf32> to vector<16x32xf32>
    %c0_5 = arith.constant 0 : index
    %c0_6 = arith.constant 0 : index
    %21 = vector.load %arg7[%c0_5, %c0_6] : memref<16x32xf32, #tpu.memory_space<vmem>>, vector<16x32xf32>
    tpu.vector_store %arg7[%c0_5, %c0_6], %20 {strides = array<i32>} : memref<16x32xf32, #tpu.memory_space<vmem>>, vector<16x32xf32>,
    %c0_7 = arith.constant 0 : index
    %c0_8 = arith.constant 0 : index
    %22 = vector.load %arg7[%c0_7, %c0_8] : memref<16x32xf32, #tpu.memory_space<vmem>>, vector<16x32xf32>
    %c0_9 = arith.constant 0 : index
    %c0_10 = arith.constant 0 : index
    %c0_11 = arith.constant 0 : index
    %23 = vector.load %arg4[%c0_9, %c0_10, %c0_11] : memref<3x32x32xf32, #tpu.memory_space<vmem>>, vector<1x32x32xf32>
    %24 = vector.shape_cast %23 : vector<1x32x32xf32> to vector<32x32xf32>
    %cst_12 = arith.constant dense<0.000000e+00> : vector<16x32xf32>
    %25 = tpu.matmul %22, %24, %cst_12 {dimension_numbers = #tpu.dot_dimension_numbers<[1], [0], [0], [1], [0, 0, 1, 1], [], []>} : vector<16x32xf32>, vector<32x32xf32>, vector<16x32xf32> -> vector<16x32xf32>
    %c0_13 = arith.constant 0 : index
    %c0_14 = arith.constant 0 : index
    %c0_15 = arith.constant 0 : index
    %26 = vector.load %arg5[%c0_13, %c0_14, %c0_15] : memref<3x1x32xf32, #tpu.memory_space<vmem>>, vector<1x1x32xf32>
    %27 = vector.shape_cast %26 : vector<1x1x32xf32> to vector<1x32xf32>
    %28 = vector.broadcast %27 : vector<1x32xf32> to vector<16x32xf32>
    %29 = arith.addf %25, %28 : vector<16x32xf32>
    %c0_16 = arith.constant 0 : index
    %c0_17 = arith.constant 0 : index
    %c0_18 = arith.constant 0 : index
    %30 = vector.load %arg8[%c0_16, %c0_17, %c0_18] : memref<3x16x32xf32, #tpu.memory_space<vmem>>, vector<1x16x32xf32>
    %31 = vector.shape_cast %30 : vector<1x16x32xf32> to vector<16x32xf32>
    %32 = vector.shape_cast %29 : vector<16x32xf32> to vector<1x16x32xf32>
    tpu.vector_store %arg8[%c0_16, %c0_17, %c0_18], %32 {strides = array<i32>} : memref<3x16x32xf32, #tpu.memory_space<vmem>>, vector<1x16x32xf32>,
    %c1 = arith.constant 1 : index
    %c0_19 = arith.constant 0 : index
    %c0_20 = arith.constant 0 : index
    %33 = vector.load %arg4[%c1, %c0_19, %c0_20] : memref<3x32x32xf32, #tpu.memory_space<vmem>>, vector<1x32x32xf32>
    %34 = vector.shape_cast %33 : vector<1x32x32xf32> to vector<32x32xf32>
    %cst_21 = arith.constant dense<0.000000e+00> : vector<16x32xf32>
    %35 = tpu.matmul %22, %34, %cst_21 {dimension_numbers = #tpu.dot_dimension_numbers<[1], [0], [0], [1], [0, 0, 1, 1], [], []>} : vector<16x32xf32>, vector<32x32xf32>, vector<16x32xf32> -> vector<16x32xf32>
    %c1_22 = arith.constant 1 : index
    %c0_23 = arith.constant 0 : index
    %c0_24 = arith.constant 0 : index
    %36 = vector.load %arg5[%c1_22, %c0_23, %c0_24] : memref<3x1x32xf32, #tpu.memory_space<vmem>>, vector<1x1x32xf32>
    %37 = vector.shape_cast %36 : vector<1x1x32xf32> to vector<1x32xf32>
    %38 = vector.broadcast %37 : vector<1x32xf32> to vector<16x32xf32>
    %39 = arith.addf %35, %38 : vector<16x32xf32>
    %c1_25 = arith.constant 1 : index
    %c0_26 = arith.constant 0 : index
    %c0_27 = arith.constant 0 : index
    %40 = vector.load %arg8[%c1_25, %c0_26, %c0_27] : memref<3x16x32xf32, #tpu.memory_space<vmem>>, vector<1x16x32xf32>
    %41 = vector.shape_cast %40 : vector<1x16x32xf32> to vector<16x32xf32>
    %42 = vector.shape_cast %39 : vector<16x32xf32> to vector<1x16x32xf32>
    tpu.vector_store %arg8[%c1_25, %c0_26, %c0_27], %42 {strides = array<i32>} : memref<3x16x32xf32, #tpu.memory_space<vmem>>, vector<1x16x32xf32>,
    %c2 = arith.constant 2 : index
    %c0_28 = arith.constant 0 : index
    %c0_29 = arith.constant 0 : index
    %43 = vector.load %arg4[%c2, %c0_28, %c0_29] : memref<3x32x32xf32, #tpu.memory_space<vmem>>, vector<1x32x32xf32>
    %44 = vector.shape_cast %43 : vector<1x32x32xf32> to vector<32x32xf32>
    %cst_30 = arith.constant dense<0.000000e+00> : vector<16x32xf32>
    %45 = tpu.matmul %22, %44, %cst_30 {dimension_numbers = #tpu.dot_dimension_numbers<[1], [0], [0], [1], [0, 0, 1, 1], [], []>} : vector<16x32xf32>, vector<32x32xf32>, vector<16x32xf32> -> vector<16x32xf32>
    %c2_31 = arith.constant 2 : index
    %c0_32 = arith.constant 0 : index
    %c0_33 = arith.constant 0 : index
    %46 = vector.load %arg5[%c2_31, %c0_32, %c0_33] : memref<3x1x32xf32, #tpu.memory_space<vmem>>, vector<1x1x32xf32>
    %47 = vector.shape_cast %46 : vector<1x1x32xf32> to vector<1x32xf32>
    %48 = vector.broadcast %47 : vector<1x32xf32> to vector<16x32xf32>
    %49 = arith.addf %45, %48 : vector<16x32xf32>
    %c2_34 = arith.constant 2 : index
    %c0_35 = arith.constant 0 : index
    %c0_36 = arith.constant 0 : index
    %50 = vector.load %arg8[%c2_34, %c0_35, %c0_36] : memref<3x16x32xf32, #tpu.memory_space<vmem>>, vector<1x16x32xf32>
    %51 = vector.shape_cast %50 : vector<1x16x32xf32> to vector<16x32xf32>
    %52 = vector.shape_cast %49 : vector<16x32xf32> to vector<1x16x32xf32>
    tpu.vector_store %arg8[%c2_34, %c0_35, %c0_36], %52 {strides = array<i32>} : memref<3x16x32xf32, #tpu.memory_space<vmem>>, vector<1x16x32xf32>,
    %c0_37 = arith.constant 0 : index
    %c0_38 = arith.constant 0 : index
    %c0_39 = arith.constant 0 : index
    %53 = vector.load %arg8[%c0_37, %c0_38, %c0_39] : memref<3x16x32xf32, #tpu.memory_space<vmem>>, vector<1x16x32xf32>
    %54 = vector.shape_cast %53 : vector<1x16x32xf32> to vector<16x32xf32>
    %55 = vector.shape_cast %54 : vector<16x32xf32> to vector<2x8x32xf32>
    %c1_40 = arith.constant 1 : index
    %c0_41 = arith.constant 0 : index
    %c0_42 = arith.constant 0 : index
    %56 = vector.load %arg8[%c1_40, %c0_41, %c0_42] : memref<3x16x32xf32, #tpu.memory_space<vmem>>, vector<1x16x32xf32>
    %57 = vector.shape_cast %56 : vector<1x16x32xf32> to vector<16x32xf32>
    %58 = vector.shape_cast %57 : vector<16x32xf32> to vector<2x8x32xf32>
    %c2_43 = arith.constant 2 : index
    %c0_44 = arith.constant 0 : index
    %c0_45 = arith.constant 0 : index
    %59 = vector.load %arg8[%c2_43, %c0_44, %c0_45] : memref<3x16x32xf32, #tpu.memory_space<vmem>>, vector<1x16x32xf32>
    %60 = vector.shape_cast %59 : vector<1x16x32xf32> to vector<16x32xf32>
    %61 = vector.shape_cast %60 : vector<16x32xf32> to vector<2x8x32xf32>
    "tpu.trace_start"() <{level = 10 : i32, message = "bqd,bkd->bqk"}> : () -> ()
    %cst_46 = arith.constant dense<0.000000e+00> : vector<2x8x8xf32>
    %62 = tpu.matmul %55, %58, %cst_46 {dimension_numbers = #tpu.dot_dimension_numbers<[2], [2], [1], [1], [0, 0, 0, 1, 1, 1], [0], [0]>} : vector<2x8x32xf32>, vector<2x8x32xf32>, vector<2x8x8xf32> -> vector<2x8x8xf32>
    "tpu.trace_stop"() : () -> ()
    %cst_47 = arith.constant dense<0xFF800000> : vector<2x8xf32>
    %63 = vector.multi_reduction <maximumf>, %62, %cst_47 [2] : vector<2x8x8xf32> to vector<2x8xf32>
    %64 = vector.shape_cast %63 : vector<2x8xf32> to vector<2x8x1xf32>
    %65 = vector.broadcast %64 : vector<2x8x1xf32> to vector<2x8x8xf32>
    %66 = arith.subf %62, %65 : vector<2x8x8xf32>
    %67 = math.exp %66 : vector<2x8x8xf32>
    %cst_48 = arith.constant dense<0.000000e+00> : vector<2x8xf32>
    %68 = vector.multi_reduction <add>, %67, %cst_48 [2] : vector<2x8x8xf32> to vector<2x8xf32>
    %69 = vector.shape_cast %68 : vector<2x8xf32> to vector<2x8x1xf32>
    %cst_49 = arith.constant 1.250000e-01 : f32
    %70 = vector.broadcast %cst_49 : f32 to vector<2x8x1xf32>
    %71 = arith.divf %70, %69 : vector<2x8x1xf32>
    %72 = vector.broadcast %71 : vector<2x8x1xf32> to vector<2x8x8xf32>
    %73 = arith.mulf %67, %72 : vector<2x8x8xf32>
    %cst_50 = arith.constant dense<0.000000e+00> : vector<2x8xf32>
    %74 = vector.multi_reduction <add>, %73, %cst_50 [1] : vector<2x8x8xf32> to vector<2x8xf32>
    %75 = vector.shape_cast %74 : vector<2x8xf32> to vector<2x1x8xf32>
    "tpu.trace_start"() <{level = 10 : i32, message = "bqk,bkd->bqd"}> : () -> ()
    %cst_51 = arith.constant dense<0.000000e+00> : vector<2x1x32xf32>
    %76 = tpu.matmul %75, %61, %cst_51 {dimension_numbers = #tpu.dot_dimension_numbers<[2], [1], [1], [2], [0, 0, 0, 1, 1, 2], [0], [0]>} : vector<2x1x8xf32>, vector<2x8x32xf32>, vector<2x1x32xf32> -> vector<2x1x32xf32>
    "tpu.trace_stop"() : () -> ()
    %77 = vector.shape_cast %76 : vector<2x1x32xf32> to vector<2x32xf32>
    %c0_52 = arith.constant 0 : index
    %c0_53 = arith.constant 0 : index
    %78 = vector.load %arg6[%c0_52, %c0_53] : memref<2x32xf32, #tpu.memory_space<vmem>>, vector<2x32xf32>
    tpu.vector_store %arg6[%c0_52, %c0_53], %77 {strides = array<i32>} : memref<2x32xf32, #tpu.memory_space<vmem>>, vector<2x32xf32>,
    return
  }
  func.func @transform_0(%arg0: i32, %arg1: i32, %arg2: i32) -> (i32, i32, i32) {
    %c0_i32 = arith.constant 0 : i32
    %c0_i32_0 = arith.constant 0 : i32
    %c0_i32_1 = arith.constant 0 : i32
    return %arg0, %c0_i32, %c0_i32_0 : i32, i32, i32
  }
  func.func @transform_1(%arg0: i32, %arg1: i32, %arg2: i32) -> (i32, i32, i32) {
    %c0_i32 = arith.constant 0 : i32
    %c0_i32_0 = arith.constant 0 : i32
    return %c0_i32, %arg2, %arg1 : i32, i32, i32
  }
  func.func @transform_2(%arg0: i32, %arg1: i32, %arg2: i32) -> (i32, i32, i32) {
    %c0_i32 = arith.constant 0 : i32
    %c0_i32_0 = arith.constant 0 : i32
    %c0_i32_1 = arith.constant 0 : i32
    return %c0_i32, %c0_i32_0, %arg1 : i32, i32, i32
  }
  func.func @transform_3(%arg0: i32, %arg1: i32, %arg2: i32) -> (i32, i32) {
    %c0_i32 = arith.constant 0 : i32
    %c0_i32_0 = arith.constant 0 : i32
    return %arg0, %c0_i32 : i32, i32
  }
}

</mosaic_0001>

<llo_original>
// kernel: cosine_al_seqnet_forward.1
$region0: #{cosine_al_seqnet_forward.1}
  #allocation0 [shape = 'u32[]', space=smem, size = 0x4, offset = 0x4, fixed_abs, tag = 'smem constant byte address 0x4 - core index']
  #allocation1 [shape = 'u32[72,128]{1,0:T(1,128)}', space=vmem, size = 0x9000, scoped, tag = 'internal scratch']
  #allocation2 [shape = 'f32[16,32]{1,0:T(8,128)}', space=vmem, size = 0x2000, scoped, tag = 'scratch operand']
  #allocation3 [shape = 'f32[3,16,32]{2,1,0:T(8,128)}', space=vmem, size = 0x6000, scoped, tag = 'scratch operand']
  %s0 = inlined_call_operand.hbm [shape: f32[2,8,32], index: 0, kind: input, shape index: {}]
  %s1 = inlined_call_operand.hbm [shape: f32[3,32,32], index: 1, kind: input, shape index: {}]
  %s2 = inlined_call_operand.hbm [shape: f32[3,1,32], index: 2, kind: input, shape index: {}]
  %s3 = inlined_call_operand.hbm [shape: f32[2,32], index: 3, kind: output, shape index: {}]
  %s4 = sld [smem:[#allocation0]]
  $region34: #{cosine_al_seqnet_forward.1} parent=0
    _
  %s6 = ssub.s32 1, %s4
  %s7 = scalar_select 0, %s6, %s4
  $region1: #{cosine_al_seqnet_forward.1} parent=0
    #allocation4 [shape = 'u8[8192]{0}', space=vmem, size = 0x2000, scoped, tag = 'input window, operand 0, single buffered']
    #allocation5 [shape = 's32[1]{0}', space=sflag, size = 0x4, scoped, tag = 'scoped memory for cosine_al_seqnet_forward.1']
    #allocation6 [shape = 's32[1]{0}', space=sflag, size = 0x4, scoped, tag = 'scoped memory for cosine_al_seqnet_forward.1']
    #allocation7 [shape = 'u8[49152]{0}', space=vmem, size = 0xc000, scoped, tag = 'input window, operand 1, single buffered']
    #allocation8 [shape = 's32[1]{0}', space=sflag, size = 0x4, scoped, tag = 'scoped memory for cosine_al_seqnet_forward.1']
    #allocation9 [shape = 'u8[1536]{0}', space=vmem, size = 0x800, scoped, tag = 'input window, operand 2, single buffered']
    #allocation10 [shape = 'u8[1024]{0}', space=vmem, size = 0x400, scoped, tag = 'output window, operand 0, single buffered']
    %8 = vsyncpa [#allocation5], 0
    %9 = vsyncpa [#allocation8], 0
    %10 = vsyncpa [#allocation6], 0
    // Predicated region
    $region2: #{cosine_al_seqnet_forward.1} parent=1 // pred_check
      _
    $region3: #{cosine_al_seqnet_forward.1} parent=1 // pred_check_branch
      %12 = sbr.rel (0) target = $region5
    $region4: #{cosine_al_seqnet_forward.1} parent=1 // pred_region
      %14 = vsyncadd [#allocation5], 0
      %s15 = sshll.u32 %s0, 4
      %s16 = int_to_ptr.hbm [resolvable:$true] %s15
      %s17 = sshll.u32 [#allocation4], 4
      %s18 = int_to_ptr.vmem [resolvable:$true] %s17
      %23 = dma.hbm_to_vmem [thread:$0]  %s16, 256, %s18, [#allocation5], 128, 128, 8
    $region5: #{cosine_al_seqnet_forward.1} parent=1 // pred_fallthru
      _
    // Predicated region
    $region6: #{cosine_al_seqnet_forward.1} parent=1 // pred_check
      _
    $region7: #{cosine_al_seqnet_forward.1} parent=1 // pred_check_branch
      %25 = sbr.rel (0) target = $region9
    $region8: #{cosine_al_seqnet_forward.1} parent=1 // pred_region
      %27 = vsyncadd [#allocation8], 0
      %s28 = sshll.u32 %s1, 4
      %s29 = int_to_ptr.hbm [resolvable:$true] %s28
      %s30 = sshll.u32 [#allocation7], 4
      %s31 = int_to_ptr.vmem [resolvable:$true] %s30
      %36 = dma.hbm_to_vmem [thread:$0]  %s29, 1536, %s31, [#allocation8], 128, 128, 8
    $region9: #{cosine_al_seqnet_forward.1} parent=1 // pred_fallthru
      _
    // Predicated region
    $region10: #{cosine_al_seqnet_forward.1} parent=1 // pred_check
      _
    $region11: #{cosine_al_seqnet_forward.1} parent=1 // pred_check_branch
      %38 = sbr.rel (0) target = $region13
    $region12: #{cosine_al_seqnet_forward.1} parent=1 // pred_region
      %40 = vsyncadd [#allocation8], 0
      %s41 = sshll.u32 %s2, 4
      %s42 = int_to_ptr.hbm [resolvable:$true] %s41
      %s43 = sshll.u32 [#allocation9], 4
      %s44 = int_to_ptr.vmem [resolvable:$true] %s43
      %49 = dma.hbm_to_vmem [thread:$0]  %s42, 48, %s44, [#allocation8], 16, 16, 1
    $region13: #{cosine_al_seqnet_forward.1} parent=1 // pred_fallthru
      _
    // Predicated region
    $region14: #{cosine_al_seqnet_forward.1} parent=1 // pred_check
      _
    $region15: #{cosine_al_seqnet_forward.1} parent=1 // pred_check_branch
      %51 = sbr.rel (0) target = $region17
    $region16: #{cosine_al_seqnet_forward.1} parent=1 // pred_region
      %53 = dma.done [#allocation5], 256
    $region17: #{cosine_al_seqnet_forward.1} parent=1 // pred_fallthru
      _
    // Predicated region
    $region18: #{cosine_al_seqnet_forward.1} parent=1 // pred_check
      _
    $region19: #{cosine_al_seqnet_forward.1} parent=1 // pred_check_branch
      %55 = sbr.rel (0) target = $region21
    $region20: #{cosine_al_seqnet_forward.1} parent=1 // pred_region
      %57 = dma.done [#allocation8], 1536
    $region21: #{cosine_al_seqnet_forward.1} parent=1 // pred_fallthru
      _
    // Predicated region
    $region22: #{cosine_al_seqnet_forward.1} parent=1 // pred_check
      _
    $region23: #{cosine_al_seqnet_forward.1} parent=1 // pred_check_branch
      %59 = sbr.rel (0) target = $region25
    $region24: #{cosine_al_seqnet_forward.1} parent=1 // pred_region
      %61 = dma.done [#allocation8], 48
    $region25: #{cosine_al_seqnet_forward.1} parent=1 // pred_fallthru
      _
    %v62 = vld [vmem:[#allocation4] sm:$0xff]
    %v63 = vld [vmem:[#allocation4 + $0x8] sm:$0xff]
    %v64 = vperm.slane %v62, 5
    %v65 = vperm.slane %v63, 5
    %v66 = vmul.f32 %v62, %v64
    %v67 = vmul.f32 %v63, %v65
    %vm68 = vcmask 261120
    %v69 = vsel %vm68, %v66, 0.0
    %70 = vadd.xlane.f32.xlu0 %v69
    %v71 = vpop.xlane.xlu0 %70
    %v72 = vsel %vm68, %v67, 0.0
    %73 = vadd.xlane.f32.xlu0 %v72
    %v74 = vpop.xlane.xlu0 %73
    %v75 = vmul.f32 %v62, %v62
    %v76 = vmul.f32 %v63, %v63
    %v77 = vsel %vm68, %v75, 0.0
    %78 = vadd.xlane.f32.xlu0 %v77
    %v79 = vpop.xlane.xlu0 %78
    %v80 = vsel %vm68, %v76, 0.0
    %81 = vadd.xlane.f32.xlu0 %v80
    %v82 = vpop.xlane.xlu0 %81
    %vm83 = vcmask 259077
    %v84 = vsel %vm83, %v75, 0.0
    %85 = vadd.xlane.f32.xlu0 %v84
    %v86 = vpop.xlane.xlu0 %85
    %v87 = vsel %vm83, %v76, 0.0
    %88 = vadd.xlane.f32.xlu0 %v87
    %v89 = vpop.xlane.xlu0 %88
    %v90 = vperm.slane %v86, 5
    %v91 = vperm.slane %v89, 5
    %v92 = vmul.f32 %v79, %v90
    %v93 = vmul.f32 %v82, %v91
    %v94 = vmax.f32 %v92, 1e-16
    %v95 = vmax.f32 %v93, 1e-16
    %v96 = vrsqrt.pop %v94
    %v97 = vmul.f32 %v96, %v94
    %v98 = vmul.f32 %v97, %v96
    %v99 = vmul.f32 0.5, %v98
    %v100 = vsub.f32 1.5, %v99
    %v101 = vmul.f32 %v96, %v100
    %vm102 = vweird.f32 %v94
    %vm103 = vweird.f32 %v96
    %vm104 = vmor %vm102, %vm103
    %v105 = vsel %vm104, %v96, %v101
    %v106 = vrsqrt.pop %v95
    %v107 = vmul.f32 %v106, %v95
    %v108 = vmul.f32 %v107, %v106
    %v109 = vmul.f32 0.5, %v108
    %v110 = vsub.f32 1.5, %v109
    %v111 = vmul.f32 %v106, %v110
    %vm112 = vweird.f32 %v95
    %vm113 = vweird.f32 %v106
    %vm114 = vmor %vm112, %vm113
    %v115 = vsel %vm114, %v106, %v111
    %v116 = vmul.f32 %v71, %v105
    %v117 = vmul.f32 %v74, %v115
    %v118 = vmul.f32 %v62, %v116
    %v119 = vmul.f32 %v63, %v117
    %120 = vst.msk [vmem:[#allocation2] sm:$0xff] %vm68, %v118
    %121 = vst.msk [vmem:[#allocation2 + $0x8] sm:$0xff] %vm68, %v119
    %v122 = vld [vmem:[#allocation2] sm:$0xff]
    %v123 = vld [vmem:[#allocation2 + $0x8] sm:$0xff]
    %v124 = vld [vmem:[#allocation7] sm:$0xff]
    %v125 = vld [vmem:[#allocation7 + $0x8] sm:$0xff]
    %v126 = vld [vmem:[#allocation7 + $0x10] sm:$0xff]
    %v127 = vld [vmem:[#allocation7 + $0x18] sm:$0xff]
    %v128 = vld [vmem:[#allocation9] sm:$0x1]
    %v130 = vperm.slane %v128, 0
    %v133 = vsel %vm68, %v122, 0
    %v136 = vsel %vm68, %v123, 0
    %138 = vmatpush.msra.mxu0 0.0
    %139 = vmatpush.msra.mxu0 0.0
    %140 = vmatpush.msra.mxu0 0.0
    %141 = vmatpush.msra.mxu0 0.0
    %142 = vmatpush.msra.mxu0 0.0
    %143 = vmatpush.msra.mxu0 0.0
    %144 = vmatpush.msra.mxu0 0.0
    %145 = vmatpush.msra.mxu0 0.0
    %146 = vmatpush.msra.mxu0 0.0
    %147 = vmatpush.msra.mxu0 0.0
    %148 = vmatpush.msra.mxu0 0.0
    %149 = vmatpush.msra.mxu0 0.0
    %150 = vmatpush.msra.mxu0 %v127
    %151 = vmatpush.msra.mxu0 %v126
    %152 = vmatpush.msra.mxu0 %v125
    %153 = vmatpush.msra.mxu0 %v124
    %154 = vmatmul.f32.gmra.mxu0 %v133
    %v155 = vpop.f32.mrf.mxu0
    %v156 = vadd.f32 %v130, %v155
    %157 = vmatmul.f32.gmra.mxu0 %v136
    %v158 = vpop.f32.mrf.mxu0
    %v159 = vadd.f32 %v130, %v158
    %160 = vdwg.mxu0
    %161 = vst.msk [vmem:[#allocation3] sm:$0xff] %vm68, %v156
    %162 = vst.msk [vmem:[#allocation3 + $0x8] sm:$0xff] %vm68, %v159
    %s163 = scalar_lea.vmem [#allocation7], 32
    %v164 = vld [vmem:[%s163] sm:$0xff]
    %v165 = vld [vmem:[%s163 + $0x8] sm:$0xff]
    %v166 = vld [vmem:[%s163 + $0x10] sm:$0xff]
    %v167 = vld [vmem:[%s163 + $0x18] sm:$0xff]
    %s168 = scalar_lea.vmem [#allocation9], 1
    %v169 = vld [vmem:[%s168] sm:$0x1]
    %v171 = vperm.slane %v169, 0
    %173 = vmatpush.msra.mxu0 0.0
    %174 = vmatpush.msra.mxu0 0.0
    %175 = vmatpush.msra.mxu0 0.0
    %176 = vmatpush.msra.mxu0 0.0
    %177 = vmatpush.msra.mxu0 0.0
    %178 = vmatpush.msra.mxu0 0.0
    %179 = vmatpush.msra.mxu0 0.0
    %180 = vmatpush.msra.mxu0 0.0
    %181 = vmatpush.msra.mxu0 0.0
    %182 = vmatpush.msra.mxu0 0.0
    %183 = vmatpush.msra.mxu0 0.0
    %184 = vmatpush.msra.mxu0 0.0
    %185 = vmatpush.msra.mxu0 %v167
    %186 = vmatpush.msra.mxu0 %v166
    %187 = vmatpush.msra.mxu0 %v165
    %188 = vmatpush.msra.mxu0 %v164
    %189 = vmatmul.f32.gmra.mxu0 %v133
    %v190 = vpop.f32.mrf.mxu0
    %v191 = vadd.f32 %v171, %v190
    %192 = vmatmul.f32.gmra.mxu0 %v136
    %v193 = vpop.f32.mrf.mxu0
    %v194 = vadd.f32 %v171, %v193
    %195 = vdwg.mxu0
    %s196 = scalar_lea.vmem [#allocation3], 16
    %197 = vst.msk [vmem:[%s196] sm:$0xff] %vm68, %v191
    %198 = vst.msk [vmem:[%s196 + $0x8] sm:$0xff] %vm68, %v194
    %s199 = scalar_lea.vmem [#allocation7], 64
    %v200 = vld [vmem:[%s199] sm:$0xff]
    %v201 = vld [vmem:[%s199 + $0x8] sm:$0xff]
    %v202 = vld [vmem:[%s199 + $0x10] sm:$0xff]
    %v203 = vld [vmem:[%s199 + $0x18] sm:$0xff]
    %s204 = scalar_lea.vmem [#allocation9], 2
    %v205 = vld [vmem:[%s204] sm:$0x1]
    %v207 = vperm.slane %v205, 0
    %209 = vmatpush.msra.mxu0 0.0
    %210 = vmatpush.msra.mxu0 0.0
    %211 = vmatpush.msra.mxu0 0.0
    %212 = vmatpush.msra.mxu0 0.0
    %213 = vmatpush.msra.mxu0 0.0
    %214 = vmatpush.msra.mxu0 0.0
    %215 = vmatpush.msra.mxu0 0.0
    %216 = vmatpush.msra.mxu0 0.0
    %217 = vmatpush.msra.mxu0 0.0
    %218 = vmatpush.msra.mxu0 0.0
    %219 = vmatpush.msra.mxu0 0.0
    %220 = vmatpush.msra.mxu0 0.0
    %221 = vmatpush.msra.mxu0 %v203
    %222 = vmatpush.msra.mxu0 %v202
    %223 = vmatpush.msra.mxu0 %v201
    %224 = vmatpush.msra.mxu0 %v200
    %225 = vmatmul.f32.gmra.mxu0 %v133
    %v226 = vpop.f32.mrf.mxu0
    %v227 = vadd.f32 %v207, %v226
    %228 = vmatmul.f32.gmra.mxu0 %v136
    %v229 = vpop.f32.mrf.mxu0
    %v230 = vadd.f32 %v207, %v229
    %231 = vdwg.mxu0
    %s232 = scalar_lea.vmem [#allocation3], 32
    %233 = vst.msk [vmem:[%s232] sm:$0xff] %vm68, %v227
    %234 = vst.msk [vmem:[%s232 + $0x8] sm:$0xff] %vm68, %v230
    %v235 = vld [vmem:[#allocation3] sm:$0xff]
    %v236 = vld [vmem:[#allocation3 + $0x8] sm:$0xff]
    %v237 = vld [vmem:[%s196] sm:$0xff]
    %v238 = vld [vmem:[%s196 + $0x8] sm:$0xff]
    %v239 = vld [vmem:[%s232] sm:$0xff]
    %v240 = vld [vmem:[%s232 + $0x8] sm:$0xff]
    %v242 = vsel %vm68, %v235, 0
    %v245 = vsel %vm68, %v237, 0
    %247 = vmatpush.xpose.msra.mxu0 0.0
    %248 = vmatpush.xpose.msra.mxu0 0.0
    %249 = vmatpush.xpose.msra.mxu0 0.0
    %250 = vmatpush.xpose.msra.mxu0 0.0
    %251 = vmatpush.xpose.msra.mxu0 0.0
    %252 = vmatpush.xpose.msra.mxu0 0.0
    %253 = vmatpush.xpose.msra.mxu0 0.0
    %254 = vmatpush.xpose.msra.mxu0 0.0
    %255 = vmatpush.xpose.msra.mxu0 0.0
    %256 = vmatpush.xpose.msra.mxu0 0.0
    %257 = vmatpush.xpose.msra.mxu0 0.0
    %258 = vmatpush.xpose.msra.mxu0 0.0
    %259 = vmatpush.xpose.msra.mxu0 0.0
    %260 = vmatpush.xpose.msra.mxu0 0.0
    %261 = vmatpush.xpose.msra.mxu0 0.0
    %262 = vmatpush.xpose.msra.mxu0 %v245
    %263 = vmatmul.f32.gmra.mxu0 %v242
    %v264 = vpop.f32.mrf.mxu0
    %v265 = vadd.f32 0.0, %v264
    %266 = vdwg.mxu0
    %v268 = vsel %vm68, %v236, 0
    %v271 = vsel %vm68, %v238, 0
    %273 = vmatpush.xpose.msra.mxu0 0.0
    %274 = vmatpush.xpose.msra.mxu0 0.0
    %275 = vmatpush.xpose.msra.mxu0 0.0
    %276 = vmatpush.xpose.msra.mxu0 0.0
    %277 = vmatpush.xpose.msra.mxu0 0.0
    %278 = vmatpush.xpose.msra.mxu0 0.0
    %279 = vmatpush.xpose.msra.mxu0 0.0
    %280 = vmatpush.xpose.msra.mxu0 0.0
    %281 = vmatpush.xpose.msra.mxu0 0.0
    %282 = vmatpush.xpose.msra.mxu0 0.0
    %283 = vmatpush.xpose.msra.mxu0 0.0
    %284 = vmatpush.xpose.msra.mxu0 0.0
    %285 = vmatpush.xpose.msra.mxu0 0.0
    %286 = vmatpush.xpose.msra.mxu0 0.0
    %287 = vmatpush.xpose.msra.mxu0 0.0
    %288 = vmatpush.xpose.msra.mxu0 %v271
    %289 = vmatmul.f32.gmra.mxu0 %v268
    %v290 = vpop.f32.mrf.mxu0
    %v291 = vadd.f32 0.0, %v290
    %292 = vdwg.mxu0
    %vm293 = vcmask 64512
    %v294 = vsel %vm293, %v265, -inf
    %295 = vmax.xlane.f32.xlu0 %v294
    %v296 = vpop.xlane.xlu0 %295
    %v297 = vsel %vm293, %v291, -inf
    %298 = vmax.xlane.f32.xlu0 %v297
    %v299 = vpop.xlane.xlu0 %298
    %v300 = vsub.f32 %v265, %v296
    %v301 = vsub.f32 %v291, %v299
    %v302 = vmul.f32 %v300, 1.442695
    %v303 = vpow.pop %v302
    %v304 = vmul.f32 %v301, 1.442695
    %v305 = vpow.pop %v304
    %v306 = vsel %vm293, %v303, 0.0
    %307 = vadd.xlane.f32.xlu0 %v306
    %v308 = vpop.xlane.xlu0 %307
    %v309 = vsel %vm293, %v305, 0.0
    %310 = vadd.xlane.f32.xlu0 %v309
    %v311 = vpop.xlane.xlu0 %310
    %v312 = vrcp.pop %v308
    %v313 = vmul.f32 %v308, %v312
    %v314 = vsub.f32 1.0, %v313
    %v315 = vmul.f32 %v312, %v314
    %v316 = vadd.f32 %v312, %v315
    %vm317 = vweird.f32 %v308
    %vm318 = vweird.f32 %v312
    %vm319 = vmor %vm317, %vm318
    %v320 = vsel %vm319, %v312, %v316
    %v321 = vand.u32 2147483647, %v308
    %vm322 = vcmp.eq.f32.partialorder %v321, 8.507059e+37
    %v323 = vand.u32 %v308, 2147483648
    %v324 = vor.u32 1.1754944e-38, %v323
    %v325 = vsel %vm322, %v324, %v320
    %v326 = vmul.f32 0.125, %v325
    %v327 = vrcp.pop %v311
    %v328 = vmul.f32 %v311, %v327
    %v329 = vsub.f32 1.0, %v328
    %v330 = vmul.f32 %v327, %v329
    %v331 = vadd.f32 %v327, %v330
    %vm332 = vweird.f32 %v311
    %vm333 = vweird.f32 %v327
    %vm334 = vmor %vm332, %vm333
    %v335 = vsel %vm334, %v327, %v331
    %v336 = vand.u32 2147483647, %v311
    %vm337 = vcmp.eq.f32.partialorder %v336, 8.507059e+37
    %v338 = vand.u32 %v311, 2147483648
    %v339 = vor.u32 1.1754944e-38, %v338
    %v340 = vsel %vm337, %v339, %v335
    %v341 = vmul.f32 0.125, %v340
    %v342 = vmul.f32 %v303, %v326
    %v343 = vmul.f32 %v305, %v341
    %v344 = vsel %vm293, %v342, 0.0
    %v345 = vrot.slane %v344, 4
    %v346 = vadd.f32 %v344, %v345
    %v347 = vrot.slane %v346, 2
    %v348 = vadd.f32 %v346, %v347
    %v349 = vrot.slane %v348, 1
    %v350 = vadd.f32 %v348, %v349
    %v351 = vsel %vm293, %v343, 0.0
    %v352 = vrot.slane %v351, 4
    %v353 = vadd.f32 %v351, %v352
    %v354 = vrot.slane %v353, 2
    %v355 = vadd.f32 %v353, %v354
    %v356 = vrot.slane %v355, 1
    %v357 = vadd.f32 %v355, %v356
    %v359 = vsel %vm293, %v350, 0
    %361 = vmatpush.msra.mxu0 0.0
    %362 = vmatpush.msra.mxu0 0.0
    %363 = vmatpush.msra.mxu0 0.0
    %364 = vmatpush.msra.mxu0 0.0
    %365 = vmatpush.msra.mxu0 0.0
    %366 = vmatpush.msra.mxu0 0.0
    %367 = vmatpush.msra.mxu0 0.0
    %368 = vmatpush.msra.mxu0 0.0
    %369 = vmatpush.msra.mxu0 0.0
    %370 = vmatpush.msra.mxu0 0.0
    %371 = vmatpush.msra.mxu0 0.0
    %372 = vmatpush.msra.mxu0 0.0
    %373 = vmatpush.msra.mxu0 0.0
    %374 = vmatpush.msra.mxu0 0.0
    %375 = vmatpush.msra.mxu0 0.0
    %376 = vmatpush.msra.mxu0 %v239
    %377 = vmatmul.f32.gmra.mxu0 %v359
    %v378 = vpop.f32.mrf.mxu0
    %v379 = vadd.f32 0.0, %v378
    %380 = vdwg.mxu0
    %v382 = vsel %vm293, %v357, 0
    %384 = vmatpush.msra.mxu0 0.0
    %385 = vmatpush.msra.mxu0 0.0
    %386 = vmatpush.msra.mxu0 0.0
    %387 = vmatpush.msra.mxu0 0.0
    %388 = vmatpush.msra.mxu0 0.0
    %389 = vmatpush.msra.mxu0 0.0
    %390 = vmatpush.msra.mxu0 0.0
    %391 = vmatpush.msra.mxu0 0.0
    %392 = vmatpush.msra.mxu0 0.0
    %393 = vmatpush.msra.mxu0 0.0
    %394 = vmatpush.msra.mxu0 0.0
    %395 = vmatpush.msra.mxu0 0.0
    %396 = vmatpush.msra.mxu0 0.0
    %397 = vmatpush.msra.mxu0 0.0
    %398 = vmatpush.msra.mxu0 0.0
    %399 = vmatpush.msra.mxu0 %v240
    %400 = vmatmul.f32.gmra.mxu0 %v382
    %v401 = vpop.f32.mrf.mxu0
    %v402 = vadd.f32 0.0, %v401
    %403 = vdwg.mxu0
    %v406 = vrot.slane %v402, 7
    %vm407 = vcmask 1041409
    %v408 = vsel %vm407, %v406, %v379
    %vm410 = vcmask 254976
    %411 = vst.msk [vmem:[#allocation10] sm:$0x3] %vm410, %v408
    // Predicated region
    $region26: #{cosine_al_seqnet_forward.1} parent=1 // pred_check
      _
    $region27: #{cosine_al_seqnet_forward.1} parent=1 // pred_check_branch
      %413 = sbr.rel (0) target = $region29
    $region28: #{cosine_al_seqnet_forward.1} parent=1 // pred_region
      %415 = vsyncadd [#allocation6], 0
      %s417 = sshll.u32 [#allocation10], 4
      %s418 = int_to_ptr.vmem [resolvable:$true] %s417
      %s419 = sshll.u32 %s3, 4
      %s420 = int_to_ptr.hbm [resolvable:$true] %s419
      %422 = dma.vmem_to_hbm [thread:$0]  %s418, 32, %s420, [#allocation6]
    $region29: #{cosine_al_seqnet_forward.1} parent=1 // pred_fallthru
      _
    // Predicated region
    $region30: #{cosine_al_seqnet_forward.1} parent=1 // pred_check
      _
    $region31: #{cosine_al_seqnet_forward.1} parent=1 // pred_check_branch
      %424 = sbr.rel (0) target = $region33
    $region32: #{cosine_al_seqnet_forward.1} parent=1 // pred_region
      %426 = dma.done [#allocation6], 32
    $region33: #{cosine_al_seqnet_forward.1} parent=1 // pred_fallthru
      _
    %427 = vsyncpa [#allocation5], 1
    %428 = vsyncpa [#allocation8], 1
    %429 = vsyncpa [#allocation6], 1

</llo_original>
